<compile_context>
chip_gen: v5e
topology: v5e:2x2
jax: 0.10.0
libtpu: 0.0.40
codegen_flags: <defaults>
</compile_context>

<pallas_src>
import functools
import math

import jax
import jax.numpy as jnp
from jax.experimental import pallas as pl
from jax.experimental.pallas import tpu as pltpu


def _eca_k_size(channels: int) -> int:
    # Same formula as the PyTorch module's __init__.
    t = int(abs(math.log2(channels) / 2 + 1))
    return t if t % 2 else t + 1


def _pick_hw_tile(hw: int, channels: int, itemsize: int,
                  max_tile_bytes: int = 4 << 20, max_lanes: int = 4096) -> int:
    """Largest lane-dense (multiple-of-128) divisor of hw within a VMEM budget.

    Falls back to the full spatial extent (always legal: block dim == array
    dim) when hw has no multiple-of-128 divisor.
    """
    lane_cap = min(max_lanes,
                   max(128, max_tile_bytes // max(1, channels * itemsize)))
    best = None
    t = 128
    while t <= min(hw, lane_cap):
        if hw % t == 0:
            best = t
        t += 128
    return best if best is not None else hw


def _vmem_limit(working_bytes: int) -> int:
    # Explicit budget so double-buffering stays intact on v7x (64 MiB physical,
    # 32 MiB scoped default) while leaving headroom on v5e/v6e.
    return int(min(max(working_bytes + (2 << 20), 16 << 20), 48 << 20))


def _eca_gate_kernel(x_ref, w_ref, gate_ref, acc_ref, *,
                     channels: int, k_size: int, inv_hw: float):
    """Pass 1: pooled mean -> 1-D channel conv -> sigmoid gate.

    Grid: (N, num_hw_tiles); the HW axis is a reduction ("arbitrary").
    x_ref:    (1, C, hw_tile) VMEM, input dtype
    w_ref:    (k,)            SMEM, f32 Conv1d weight (no bias)
    gate_ref: (1, C, 1)       VMEM, f32 output (written on the last tile)
    acc_ref:  (1, C)          VMEM, f32 partial-sum scratch
    """
    t = pl.program_id(1)

    @pl.when(t == 0)
    def _init():
        acc_ref[...] = jnp.zeros_like(acc_ref)

    # f32 partial spatial sum of this lane tile; no f32 copy of the full tile
    # is materialized (reduction accumulates in f32).
    acc_ref[...] += jnp.sum(x_ref[...], axis=-1, dtype=jnp.float32)  # (1, C)

    @pl.when(t == pl.num_programs(1) - 1)
    def _finalize():
        pooled = acc_ref[...] * inv_hw                     # (1, C) global mean
        pad = k_size // 2
        if pad > 0:
            zeros = jnp.zeros((1, pad), jnp.float32)
            padded = jnp.concatenate([zeros, pooled, zeros], axis=1)
        else:
            padded = pooled
        # PyTorch Conv1d is cross-correlation (no kernel flip); tiny static loop.
        conv = w_ref[0] * padded[:, 0:channels]
        for j in range(1, k_size):
            conv = conv + w_ref[j] * padded[:, j:j + channels]
        gate_ref[...] = jax.nn.sigmoid(conv)[:, :, None]   # (1, C, 1) f32


def _eca_scale_kernel(x_ref, g_ref, o_ref):
    """Pass 2: streaming per-channel rescale, in the input dtype.

    x_ref: (1, C, hw_tile); g_ref: (1, C, 1) f32; o_ref: (1, C, hw_tile).
    """
    o_ref[...] = x_ref[...] * g_ref[...].astype(o_ref.dtype)


def eca_forward(x: jax.Array, conv_weight: jax.Array) -> jax.Array:
    """x: (N, C, H, W); conv_weight: (k,) (or (1,1,k)) f32. Returns (N, C, H, W)."""
    N, C, H, W = x.shape
    conv_weight = conv_weight.reshape(-1).astype(jnp.float32)
    k = int(conv_weight.shape[0])
    hw = H * W
    xr = x.reshape(N, C, hw)

    hw_tile = _pick_hw_tile(hw, C, x.dtype.itemsize)
    num_t = hw // hw_tile
    tile_bytes = C * hw_tile * x.dtype.itemsize

    gate_kernel = functools.partial(
        _eca_gate_kernel, channels=C, k_size=k, inv_hw=1.0 / hw)

    # Pass 1: per-(batch, channel) sigmoid gate, shape (N, C, 1), f32.
    gate = pl.pallas_call(
        gate_kernel,
        out_shape=jax.ShapeDtypeStruct((N, C, 1), jnp.float32),
        grid=(N, num_t),
        in_specs=[
            pl.BlockSpec((1, C, hw_tile), lambda n, t: (n, 0, t)),
            pl.BlockSpec(memory_space=pltpu.MemorySpace.SMEM),
        ],
        out_specs=pl.BlockSpec((1, C, 1), lambda n, t: (n, 0, 0)),
        scratch_shapes=[pltpu.VMEM((1, C), jnp.float32)],
        compiler_params=pltpu.CompilerParams(
            dimension_semantics=("parallel", "arbitrary"),
            vmem_limit_bytes=_vmem_limit(3 * tile_bytes),
        ),
    )(xr, conv_weight)

    # Pass 2: HBM-bound streaming rescale with lane-dense tiles; both grid
    # axes are independent ("parallel") so megacore can split the work.
    out = pl.pallas_call(
        _eca_scale_kernel,
        out_shape=jax.ShapeDtypeStruct((N, C, hw), x.dtype),
        grid=(N, num_t),
        in_specs=[
            pl.BlockSpec((1, C, hw_tile), lambda n, t: (n, 0, t)),
            pl.BlockSpec((1, C, 1), lambda n, t: (n, 0, 0)),
        ],
        out_specs=pl.BlockSpec((1, C, hw_tile), lambda n, t: (n, 0, t)),
        compiler_params=pltpu.CompilerParams(
            dimension_semantics=("parallel", "parallel"),
            vmem_limit_bytes=_vmem_limit(5 * tile_bytes),
        ),
    )(xr, gate)

    return out.reshape(N, C, H, W)


def eca_reference(x: jax.Array, conv_weight: jax.Array) -> jax.Array:
    """Pure-JAX reference mirroring the PyTorch forward."""
    N, C, H, W = x.shape
    w = conv_weight.reshape(-1)
    k = int(w.shape[0])
    pad = k // 2
    pooled = x.astype(jnp.float32).mean(axis=(2, 3))          # (N, C)
    padded = jnp.pad(pooled, ((0, 0), (pad, pad)))            # (N, C + 2*pad)
    y = sum(w[j] * padded[:, j:j + C] for j in range(k))
    gate = jax.nn.sigmoid(y)                                  # (N, C)
    return (x.astype(jnp.float32) * gate[:, :, None, None]).astype(x.dtype)


if __name__ == "__main__":
    N, C, H, W = 2, 4, 16, 16
    k_size = _eca_k_size(C)   # C=4 -> t=2 (even) -> k=3

    key = jax.random.PRNGKey(0)
    kx, kw = jax.random.split(key)
    x = jax.random.normal(kx, (N, C, H, W), dtype=jnp.float32)
    # Deterministic Conv1d weight of shape (out=1, in=1, k) -> stored flat (k,)
    bound = 1.0 / math.sqrt(k_size)
    conv_weight = jax.random.uniform(
        kw, (k_size,), dtype=jnp.float32, minval=-bound, maxval=bound)

    out = eca_forward(x, conv_weight)
    out = jax.block_until_ready(out)

    ref = eca_reference(x, conv_weight)
    assert out.shape == (N, C, H, W)
    assert jnp.allclose(out, ref, atol=1e-5, rtol=1e-5), "mismatch vs reference"

    print("KERNEL_OK")
</pallas_src>

<mosaic_0001>
module attributes {stable_mosaic.version = 11 : i64} {
  func.func @_eca_gate_kernel(%arg0: i32, %arg1: i32, %arg2: memref<1x4x256xf32, #tpu.memory_space<vmem>>, %arg3: memref<3xf32, #tpu.memory_space<smem>>, %arg4: memref<1x4x1xf32, #tpu.memory_space<vmem>>, %arg5: memref<1x4xf32, #tpu.memory_space<vmem>>) attributes {dimension_semantics = [#tpu.dimension_semantics<parallel>, #tpu.dimension_semantics<arbitrary>], iteration_bounds = array<i64: 2, 1>, scalar_prefetch = 0 : i64, scratch_operands = 1 : i64, tpu.core_type = #tpu.core_type<tc>, window_params = [{transform_indices = @transform_0, window_bounds = array<i64: 1, 4, 256>}, {transform_indices = @transform_1, window_bounds = array<i64: 3>}, {transform_indices = @transform_2, window_bounds = array<i64: 1, 4, 1>}]} {
    %c0_i32 = arith.constant 0 : i32
    %0 = arith.cmpi eq, %arg1, %c0_i32 : i32
    %1 = arith.extui %0 : i1 to i32
    %c0_i32_0 = arith.constant 0 : i32
    %2 = arith.cmpi ne, %1, %c0_i32_0 : i32
    scf.if %2 {
      %cst_9 = arith.constant 0.000000e+00 : f32
      %11 = vector.broadcast %cst_9 : f32 to vector<1x4xf32>
      %c0_10 = arith.constant 0 : index
      %c0_11 = arith.constant 0 : index
      %12 = vector.load %arg5[%c0_10, %c0_11] : memref<1x4xf32, #tpu.memory_space<vmem>>, vector<1x4xf32>
      tpu.vector_store %arg5[%c0_10, %c0_11], %11 {strides = array<i32>} : memref<1x4xf32, #tpu.memory_space<vmem>>, vector<1x4xf32>,
    } else {
    }
    %c0 = arith.constant 0 : index
    %c0_1 = arith.constant 0 : index
    %3 = vector.load %arg5[%c0, %c0_1] : memref<1x4xf32, #tpu.memory_space<vmem>>, vector<1x4xf32>
    %c0_2 = arith.constant 0 : index
    %c0_3 = arith.constant 0 : index
    %c0_4 = arith.constant 0 : index
    %4 = vector.load %arg2[%c0_2, %c0_3, %c0_4] : memref<1x4x256xf32, #tpu.memory_space<vmem>>, vector<1x4x256xf32>
    %cst = arith.constant dense<0.000000e+00> : vector<1x4xf32>
    %5 = vector.multi_reduction <add>, %4, %cst [2] : vector<1x4x256xf32> to vector<1x4xf32>
    %6 = arith.addf %3, %5 : vector<1x4xf32>
    %c0_5 = arith.constant 0 : index
    %c0_6 = arith.constant 0 : index
    %7 = vector.load %arg5[%c0_5, %c0_6] : memref<1x4xf32, #tpu.memory_space<vmem>>, vector<1x4xf32>
    tpu.vector_store %arg5[%c0_5, %c0_6], %6 {strides = array<i32>} : memref<1x4xf32, #tpu.memory_space<vmem>>, vector<1x4xf32>,
    %c0_i32_7 = arith.constant 0 : i32
    %8 = arith.cmpi eq, %arg1, %c0_i32_7 : i32
    %9 = arith.extui %8 : i1 to i32
    %c0_i32_8 = arith.constant 0 : i32
    %10 = arith.cmpi ne, %9, %c0_i32_8 : i32
    scf.if %10 {
      %c0_9 = arith.constant 0 : index
      %c0_10 = arith.constant 0 : index
      %11 = vector.load %arg5[%c0_9, %c0_10] : memref<1x4xf32, #tpu.memory_space<vmem>>, vector<1x4xf32>
      %cst_11 = arith.constant 3.906250e-03 : f32
      %12 = vector.broadcast %cst_11 : f32 to vector<1x4xf32>
      %13 = arith.mulf %11, %12 : vector<1x4xf32>
      %cst_12 = arith.constant 0.000000e+00 : f32
      %14 = vector.broadcast %cst_12 : f32 to vector<1x1xf32>
      %15 = tpu.concatenate %14, %13, %14 in 1 : vector<1x1xf32>, vector<1x4xf32>, vector<1x1xf32> -> vector<1x6xf32>
      %c0_13 = arith.constant 0 : index
      %16 = memref.load %arg3[%c0_13] : memref<3xf32, #tpu.memory_space<smem>>
      %17 = vector.extract_strided_slice %15 {offsets = [0, 0], sizes = [1, 4], strides = [1, 1]} : vector<1x6xf32> to vector<1x4xf32>
      %18 = vector.broadcast %16 : f32 to vector<1x4xf32>
      %19 = arith.mulf %18, %17 : vector<1x4xf32>
      %c1 = arith.constant 1 : index
      %20 = memref.load %arg3[%c1] : memref<3xf32, #tpu.memory_space<smem>>
      %21 = vector.extract_strided_slice %15 {offsets = [0, 1], sizes = [1, 4], strides = [1, 1]} : vector<1x6xf32> to vector<1x4xf32>
      %22 = vector.broadcast %20 : f32 to vector<1x4xf32>
      %23 = arith.mulf %22, %21 : vector<1x4xf32>
      %24 = arith.addf %19, %23 : vector<1x4xf32>
      %c2 = arith.constant 2 : index
      %25 = memref.load %arg3[%c2] : memref<3xf32, #tpu.memory_space<smem>>
      %26 = vector.extract_strided_slice %15 {offsets = [0, 2], sizes = [1, 4], strides = [1, 1]} : vector<1x6xf32> to vector<1x4xf32>
      %27 = vector.broadcast %25 : f32 to vector<1x4xf32>
      %28 = arith.mulf %27, %26 : vector<1x4xf32>
      %29 = arith.addf %24, %28 : vector<1x4xf32>
      %30 = arith.negf %29 : vector<1x4xf32>
      %31 = math.exp %30 : vector<1x4xf32>
      %cst_14 = arith.constant 1.000000e+00 : f32
      %32 = vector.broadcast %cst_14 : f32 to vector<1x4xf32>
      %33 = arith.addf %32, %31 : vector<1x4xf32>
      %34 = arith.divf %32, %33 : vector<1x4xf32>
      %35 = vector.shape_cast %34 : vector<1x4xf32> to vector<1x4x1xf32>
      %c0_15 = arith.constant 0 : index
      %c0_16 = arith.constant 0 : index
      %c0_17 = arith.constant 0 : index
      %36 = vector.load %arg4[%c0_15, %c0_16, %c0_17] : memref<1x4x1xf32, #tpu.memory_space<vmem>>, vector<1x4x1xf32>
      tpu.vector_store %arg4[%c0_15, %c0_16, %c0_17], %35 {strides = array<i32>} : memref<1x4x1xf32, #tpu.memory_space<vmem>>, vector<1x4x1xf32>,
    } else {
    }
    return
  }
  func.func @transform_0(%arg0: i32, %arg1: i32) -> (i32, i32, i32) {
    %c0_i32 = arith.constant 0 : i32
    %c0_i32_0 = arith.constant 0 : i32
    return %arg0, %c0_i32, %arg1 : i32, i32, i32
  }
  func.func @transform_1(%arg0: i32, %arg1: i32) -> i32 {
    %c0_i32 = arith.constant 0 : i32
    %c0_i32_0 = arith.constant 0 : i32
    return %c0_i32 : i32
  }
  func.func @transform_2(%arg0: i32, %arg1: i32) -> (i32, i32, i32) {
    %c0_i32 = arith.constant 0 : i32
    %c0_i32_0 = arith.constant 0 : i32
    %c0_i32_1 = arith.constant 0 : i32
    return %arg0, %c0_i32, %c0_i32_0 : i32, i32, i32
  }
}

</mosaic_0001>

<llo_original>
// kernel: tpu_custom_call.1
$region0: #{tpu_custom_call.1}
  #allocation0 [shape = 'u32[]', space=smem, size = 0x4, offset = 0x4, fixed_abs, tag = 'smem constant byte address 0x4 - core index']
  #allocation1 [shape = 'u32[72,128]{1,0:T(1,128)}', space=vmem, size = 0x9000, scoped, tag = 'internal scratch']
  #allocation2 [shape = 'f32[1,4]{1,0:T(1,128)}', space=vmem, size = 0x200, scoped, tag = 'scratch operand']
  %s0 = inlined_call_operand.hbm [shape: f32[2,4,256], index: 0, kind: input, shape index: {}]
  %s1 = inlined_call_operand.hbm [shape: f32[3], index: 1, kind: input, shape index: {}]
  %s2 = inlined_call_operand.vmem [shape: f32[2,4,1], index: 2, kind: output, shape index: {}]
  %s3 = sld [smem:[#allocation0]]
  $region57: #{tpu_custom_call.1} parent=0
    _
  %s5 = ssub.s32 1, %s3
  %s6 = scalar_select 0, %s5, %s3
  $region1: #{tpu_custom_call.1} parent=0
    #allocation3 [shape = 'u8[8192]{0}', space=vmem, size = 0x2000, scoped, tag = 'input window, operand 0']
    #allocation4 [shape = 's32[2]{0}', space=sflag, size = 0x8, scoped, tag = 'scoped memory for tpu_custom_call.1']
    #allocation5 [shape = 's32[2]{0}', space=sflag, size = 0x8, scoped, tag = 'scoped memory for tpu_custom_call.1']
    #allocation6 [shape = 'u8[512]{0}', space=smem, size = 0x200, scoped, tag = 'input window, operand 1, single buffered']
    %7 = vsyncpa [#allocation4], 0
    %s8 = scalar_lea.sflag [#allocation4], 1
    %9 = vsyncpa %s8, 0
    %10 = vsyncpa [#allocation5], 0
    loop: start=0, step=1, limit=4
    $region2: #{tpu_custom_call.1} parent=1 // loop_pre_header
      _
    $region3: #{tpu_custom_call.1} parent=1 // loop_header
      %s12 = sphi 0, %s16
      %p13 = scmp.ge.s32.totalorder %s12, 4
      %s19 = sphi 0, %s31
      %s20 = sphi 0, %s27
      %s21 = sphi 0, %s19
      %s22 = sphi 0, %s20
      %s23 = sphi 0, %s21
      %s24 = sphi 0, %s22
      %s36 = sphi 0, %s38
      %s39 = sphi 0, %s36
      %s40 = sphi 0, %s39
      %s56 = sphi 0, %s40
      %s60 = sphi 0, %s60
      %s62 = sphi 0, %s60
      %s63 = sphi 0, %s62
      %s77 = sphi 0, %s63
      %s83 = sphi 0, %s85
      %s86 = sphi 0, %s83
      %s87 = sphi 0, %s86
      %s103 = sphi 0, %s87
    $region4: #{tpu_custom_call.1} parent=1 // loop_header_branch
      %15 = sbr.rel (%p13) target = $region8
    $region5: #{tpu_custom_call.1} parent=1 // loop_body
      %s17 = ssub.s32 %s12, 1
      %s18 = ssub.s32 %s12, 2
      %s25 = sadd.s32 1, %s20
      %p26 = scmp.ge.s32.totalorder %s25, 1
      %s27 = scalar_select %p26, 0, %s25
      %s28 = sadd.s32 1, %s19
      %s29 = scalar_select %p26, %s28, %s19
      %p30 = scmp.ge.s32.totalorder %s29, 2
      %s31 = scalar_select %p30, 0, %s29
      %s32 = ssub.s32 %s19, %s31
      %s33 = ssub.s32 %s20, %s27
      %s34 = sor.u32 %s32, %s33
      %p35 = scmp.eq.s32.totalorder %s34, 0
      %s37 = sadd.s32 %s36, 1
      %s38 = scalar_select %p35, %s36, %s37
      %p41 = pneg %p35
      %p42 = scmp.eq.s32.totalorder %s12, 1
      %p43 = por %p41, %p42
      %p44 = scmp.ne.s32.totalorder %s36, %s39
      %p45 = scmp.eq.s32.totalorder %s12, 0
      %p46 = por %p44, %p45
      %p47 = scmp.ne.s32.totalorder %s36, %s39
      %p48 = scmp.eq.s32.totalorder %s17, 1
      %p49 = por %p47, %p48
      %p50 = scmp.ne.s32.totalorder %s39, %s40
      %p51 = scmp.eq.s32.totalorder %s17, 0
      %p52 = por %p50, %p51
      %p53 = scmp.ne.s32.totalorder %s39, %s40
      %p54 = scmp.eq.s32.totalorder %s18, 1
      %p55 = por %p53, %p54
      %p57 = scmp.ne.s32.totalorder %s40, %s56
      %p58 = scmp.eq.s32.totalorder %s18, 0
      %p59 = por %p57, %p58
      %s61 = sadd.s32 %s60, 1
      %p64 = scmp.eq.s32.totalorder %s12, 1
      %p65 = scmp.ne.s32.totalorder %s60, %s62
      %p66 = scmp.eq.s32.totalorder %s12, 0
      %p67 = por %p65, %p66
      %p68 = scmp.ne.s32.totalorder %s60, %s62
      %p69 = scmp.eq.s32.totalorder %s17, 1
      %p70 = por %p68, %p69
      %p71 = scmp.ne.s32.totalorder %s62, %s63
      %p72 = scmp.eq.s32.totalorder %s17, 0
      %p73 = por %p71, %p72
      %p74 = scmp.ne.s32.totalorder %s62, %s63
      %p75 = scmp.eq.s32.totalorder %s18, 1
      %p76 = por %p74, %p75
      %p78 = scmp.ne.s32.totalorder %s63, %s77
      %p79 = scmp.eq.s32.totalorder %s18, 0
      %p80 = por %p78, %p79
      %s81 = ssub.s32 %s19, %s31
      %p82 = scmp.eq.s32.totalorder %s81, 0
      %s84 = sadd.s32 %s83, 1
      %s85 = scalar_select %p82, %s83, %s84
      %p88 = pneg %p82
      %p89 = scmp.eq.s32.totalorder %s12, 1
      %p90 = por %p88, %p89
      %p91 = scmp.ne.s32.totalorder %s83, %s86
      %p92 = scmp.eq.s32.totalorder %s12, 0
      %p93 = por %p91, %p92
      %p94 = scmp.ne.s32.totalorder %s83, %s86
      %p95 = scmp.eq.s32.totalorder %s17, 1
      %p96 = por %p94, %p95
      %p97 = scmp.ne.s32.totalorder %s86, %s87
      %p98 = scmp.eq.s32.totalorder %s17, 0
      %p99 = por %p97, %p98
      %p100 = scmp.ne.s32.totalorder %s86, %s87
      %p101 = scmp.eq.s32.totalorder %s18, 1
      %p102 = por %p100, %p101
      %p104 = scmp.ne.s32.totalorder %s87, %s103
      %p105 = scmp.eq.s32.totalorder %s18, 0
      %p106 = por %p104, %p105
      %p107 = scmp.le.s32.totalorder 1, %s12
      %p108 = scmp.lt.s32.totalorder %s12, 3
      %p109 = pnand %p107, %p108
      %p110 = pneg %p109
      // Predicated region
      $region9: #{tpu_custom_call.1} parent=5 // pred_check
        _
      $region10: #{tpu_custom_call.1} parent=5 // pred_check_branch
        %112 = sbr.rel (%p109) target = $region12
      $region11: #{tpu_custom_call.1} parent=5 // pred_region
        %s113 = ssub.s32 %s12, 1
        // Predicated region
        $region13: #{tpu_custom_call.1} parent=11 // pred_check
          %p114 = pneg %p73
        $region14: #{tpu_custom_call.1} parent=11 // pred_check_branch
          %116 = sbr.rel (%p114) target = $region16
        $region15: #{tpu_custom_call.1} parent=11 // pred_region
          %118 = vsyncadd [#allocation5], 0
          %s120 = sshll.u32 %s1, 4
          %s121 = int_to_ptr.hbm [resolvable:$true] %s120
          %123 = dma.hbm_to_smem %s121, 16, [#allocation6], [#allocation5]
        $region16: #{tpu_custom_call.1} parent=11 // pred_fallthru
          _
      $region12: #{tpu_custom_call.1} parent=5 // pred_fallthru
        _
      %p124 = scmp.lt.s32.totalorder %s12, 2
      // Predicated region
      $region17: #{tpu_custom_call.1} parent=5 // pred_check
        %p125 = pneg %p124
      $region18: #{tpu_custom_call.1} parent=5 // pred_check_branch
        %127 = sbr.rel (%p125) target = $region20
      $region19: #{tpu_custom_call.1} parent=5 // pred_region
        // Predicated region
        $region21: #{tpu_custom_call.1} parent=19 // pred_check
          %p128 = pneg %p46
        $region22: #{tpu_custom_call.1} parent=19 // pred_check_branch
          %130 = sbr.rel (%p128) target = $region24
        $region23: #{tpu_custom_call.1} parent=19 // pred_region
          %s131 = sand.u32 %s36, 1
          %s132 = scalar_lea.sflag [#allocation4], %s131
          %s133 = sand.u32 %s36, 1
          %s134 = smul.addr %s133, 8
          %s135 = scalar_lea.vmem [#allocation3], %s134
          %s136 = smul.u32 2, %s20
          %138 = vsyncadd %s132, 0
          %s139 = smul.addr %s19, 2
          %s140 = sadd.s32 %s136, %s139
          %s141 = smul.addr %s140, 4
          %s142 = scalar_lea.hbm %s0, %s141
          %s144 = sshll.u32 %s142, 4
          %s145 = int_to_ptr.hbm [resolvable:$true] %s144
          %s146 = sshll.u32 %s135, 4
          %s147 = int_to_ptr.vmem [resolvable:$true] %s146
          %149 = dma.hbm_to_vmem [thread:$0]  %s145, 128, %s147, %s132
        $region24: #{tpu_custom_call.1} parent=19 // pred_fallthru
          _
      $region20: #{tpu_custom_call.1} parent=5 // pred_fallthru
        _
      %p150 = scmp.le.s32.totalorder 1, %s12
      %p151 = scmp.lt.s32.totalorder %s12, 3
      %p152 = pnand %p150, %p151
      %p153 = pneg %p152
      // Predicated region
      $region25: #{tpu_custom_call.1} parent=5 // pred_check
        _
      $region26: #{tpu_custom_call.1} parent=5 // pred_check_branch
        %155 = sbr.rel (%p152) target = $region28
      $region27: #{tpu_custom_call.1} parent=5 // pred_region
        %s156 = ssub.s32 %s12, 1
        %s157 = sand.u32 %s39, 1
        %s158 = scalar_lea.sflag [#allocation4], %s157
        %s159 = sand.u32 %s39, 1
        %s160 = smul.addr %s159, 8
        %s161 = scalar_lea.vmem [#allocation3], %s160
        // Predicated region
        $region29: #{tpu_custom_call.1} parent=27 // pred_check
          %p162 = pneg %p52
        $region30: #{tpu_custom_call.1} parent=27 // pred_check_branch
          %164 = sbr.rel (%p162) target = $region32
        $region31: #{tpu_custom_call.1} parent=27 // pred_region
          %166 = dma.done %s158, 128
        $region32: #{tpu_custom_call.1} parent=27 // pred_fallthru
          _
        // Predicated region
        $region33: #{tpu_custom_call.1} parent=27 // pred_check
          %p167 = pneg %p73
        $region34: #{tpu_custom_call.1} parent=27 // pred_check_branch
          %169 = sbr.rel (%p167) target = $region36
        $region35: #{tpu_custom_call.1} parent=27 // pred_region
          %171 = dma.done [#allocation5], 16
        $region36: #{tpu_custom_call.1} parent=27 // pred_fallthru
          _
        %172 = sfence
        %s173 = sand.u32 %s39, 1
        %s174 = scalar_lea.sflag [#allocation4], %s173
        %s175 = sand.u32 %s39, 1
        %s176 = smul.addr %s175, 8
        %s177 = scalar_lea.vmem [#allocation3], %s176
        %p178 = pneg %p52
        %p179 = pneg %p49
        %p180 = pneg %p73
        %p181 = pneg %p70
        %p182 = pneg %p99
        %p183 = pneg %p96
        %p184 = scmp.lt.s32.totalorder %s21, 1
        %s185 = scalar_select %p184, %s21, 1
        %s186 = smul.addr %s185, 4
        %s187 = scalar_lea.vmem %s2, %s186
        %s188 = smul.u32 2, %s22
        %p189 = scmp.lt.s32.totalorder %s21, 1
        %s190 = scalar_select %p189, %s21, 1
        %s191 = smul.addr %s190, 4
        %s192 = scalar_lea.vmem %s2, %s191
        %p193 = scmp.eq.s32.totalorder %s22, 0
        // Predicated region
        $region37: #{tpu_custom_call.1} parent=27 // pred_check
          %p194 = pneg %p193
        $region38: #{tpu_custom_call.1} parent=27 // pred_check_branch
          %196 = sbr.rel (%p194) target = $region40
        $region39: #{tpu_custom_call.1} parent=27 // pred_region
          %vm197 = vcmask 24576
          %198 = vst.msk [vmem:[#allocation2] sm:$0x1] %vm197, 0.0
        $region40: #{tpu_custom_call.1} parent=27 // pred_fallthru
          _
        %v199 = vld [vmem:[#allocation2] sm:$0x1]
        %v200 = vld [vmem:[%s161] sm:$0xff]
        %202 = vst [vmem:[#allocation1] ss:$2 sm:$0xff] %v200
        %v203 = vld.sshfl [vmem:[#allocation1] sm:$0xff pattern:$0x75316420]
        %v204 = vld.sshfl [vmem:[#allocation1 + $0x8] sm:$0xff pattern:$0x75316420]
        %vm207 = vcmask 1043456
        %v208 = vsel %vm207, %v203, 0.0
        %v209 = vsel %vm207, %v204, 0.0
        %v210 = vadd.f32 %v208, %v209
        %211 = vadd.xlane.f32.xlu0 %v210
        %v212 = vpop.xlane.xlu0 %211
        %v214 = vperm.slane %v212, 0
        %v215 = vperm.slane %v212, 1
        %v216 = vperm.slane %v212, 2
        %v217 = vperm.slane %v212, 3
        %218 = vst [vmem:[#allocation1] ss:$9 sm:$0xff] %v214
        %s219 = scalar_lea.vmem [#allocation1], 1
        %220 = vst [vmem:[%s219] ss:$9 sm:$0xff] %v215
        %s221 = scalar_lea.vmem [#allocation1], 2
        %222 = vst [vmem:[%s221] ss:$9 sm:$0xff] %v216
        %s223 = scalar_lea.vmem [#allocation1], 3
        %224 = vst [vmem:[%s223] ss:$9 sm:$0xff] %v217
        %v225 = vld [vmem:[#allocation1] sm:$0xff]
        %226 = vset.pattern.permute.xlu0 0
        %227 = vperm.xlu0 %226, %v225
        %v228 = vpop.permute.xlu0 %227
        %v229 = vlaneseq
        %v230 = vand.u32 %v229, 127
        %v231 = vperm.slane %v228, %v230
        %v233 = vadd.f32 %v199, %v231
        %vm234 = vcmask 24576
        %235 = vst.msk [vmem:[#allocation2] sm:$0x1] %vm234, %v233
        // Predicated region
        $region41: #{tpu_custom_call.1} parent=27 // pred_check
          %p236 = pneg %p193
        $region42: #{tpu_custom_call.1} parent=27 // pred_check_branch
          %238 = sbr.rel (%p236) target = $region44
        $region43: #{tpu_custom_call.1} parent=27 // pred_region
          %v239 = vld [vmem:[#allocation2] sm:$0x1]
          %v240 = vmul.f32 %v239, 0.00390625
          %v242 = vperm.slane %v240, 0
          %243 = vrot.lane.b32.xlu0 %v242, 1
          %v244 = vpop.permute.xlu0 %243
          %vm246 = vcmask 7168
          %v247 = vsel %vm246, 0.0, %v244
          %vm248 = vcmask 39936
          %v249 = vsel %vm248, %v247, 0.0
          %s250 = sld [smem:[#allocation6]]
          %v251 = vstv %s250
          %v252 = vmul.f32 %v251, %v249
          %s253 = sld [smem:[#allocation6 + $0x1]]
          %v254 = vstv %s253
          %v255 = vmul.f32 %v254, %v249
          %257 = vrot.lane.b32.xlu0 %v255, 127
          %v258 = vpop.permute.xlu0 %257
          %v260 = vadd.f32 %v252, %v258
          %s261 = sld [smem:[#allocation6 + $0x2]]
          %v262 = vstv %s261
          %v263 = vmul.f32 %v262, %v249
          %265 = vrot.lane.b32.xlu0 %v263, 126
          %v266 = vpop.permute.xlu0 %265
          %v268 = vadd.f32 %v260, %v266
          %v269 = vxor.u32 %v268, 2147483648
          %v270 = vmul.f32 %v269, 1.442695
          %v271 = vpow.pop %v270
          %v272 = vadd.f32 %v271, 1.0
          %v273 = vrcp.pop %v272
          %v274 = vmul.f32 %v272, %v273
          %v275 = vsub.f32 1.0, %v274
          %v276 = vmul.f32 %v273, %v275
          %v277 = vadd.f32 %v273, %v276
          %vm278 = vweird.f32 %v272
          %vm279 = vweird.f32 %v273
          %vm280 = vmor %vm278, %vm279
          %v281 = vsel %vm280, %v273, %v277
          %v282 = vand.u32 2147483647, %v272
          %vm283 = vcmp.eq.f32.partialorder %v282, 8.507059e+37
          %v284 = vand.u32 %v272, 2147483648
          %v285 = vor.u32 1.1754944e-38, %v284
          %v286 = vsel %vm283, %v285, %v281
          %v287 = vmul.f32 1.0, %v286
          %v288 = vperm.slane %v287, 0
          %v289 = vlaneseq
          %v290 = vshrl.u32 %v289, 7
          %292 = vset.pattern.permute.xlu0 %v290
          %293 = vperm.xlu0 %292, %v288
          %v294 = vpop.permute.xlu0 %293
          %vm295 = vcmask 3072
          %296 = vst.msk [vmem:[%s192] sm:$0xf] %vm295, %v294
        $region44: #{tpu_custom_call.1} parent=27 // pred_fallthru
          _
        %p297 = scmp.lt.s32.totalorder %s21, 1
        %s298 = scalar_select %p297, %s21, 1
        %s299 = smul.addr %s298, 4
        %s300 = scalar_lea.vmem %s2, %s299
        // Predicated region
        $region45: #{tpu_custom_call.1} parent=27 // pred_check
          %p301 = pneg %p96
        $region46: #{tpu_custom_call.1} parent=27 // pred_check_branch
          %303 = sbr.rel (%p301) target = $region48
        $region47: #{tpu_custom_call.1} parent=27 // pred_region
          _
        $region48: #{tpu_custom_call.1} parent=27 // pred_fallthru
          _
      $region28: #{tpu_custom_call.1} parent=5 // pred_fallthru
        _
      %p304 = scmp.le.s32.totalorder 2, %s12
      // Predicated region
      $region49: #{tpu_custom_call.1} parent=5 // pred_check
        %p305 = pneg %p304
      $region50: #{tpu_custom_call.1} parent=5 // pred_check_branch
        %307 = sbr.rel (%p305) target = $region52
      $region51: #{tpu_custom_call.1} parent=5 // pred_region
        %s308 = ssub.s32 %s12, 2
        // Predicated region
        $region53: #{tpu_custom_call.1} parent=51 // pred_check
          %p309 = pneg %p102
        $region54: #{tpu_custom_call.1} parent=51 // pred_check_branch
          %311 = sbr.rel (%p309) target = $region56
        $region55: #{tpu_custom_call.1} parent=51 // pred_region
          %p312 = scmp.lt.s32.totalorder %s23, 1
          %s313 = scalar_select %p312, %s23, 1
          %s314 = smul.addr %s313, 4
          %s315 = scalar_lea.vmem %s2, %s314
        $region56: #{tpu_custom_call.1} parent=51 // pred_fallthru
          _
      $region52: #{tpu_custom_call.1} parent=5 // pred_fallthru
        _
    $region6: #{tpu_custom_call.1} parent=1 // loop_footer
      %s16 = sadd.s32 1, %s12
    $region7: #{tpu_custom_call.1} parent=1 // loop_footer_branch
      %11 = sbr.rel target = $region3
    $region8: #{tpu_custom_call.1} parent=1 // loop_exit
      _
    %316 = vsyncpa [#allocation4], 1
    %s317 = scalar_lea.sflag [#allocation4], 1
    %318 = vsyncpa %s317, 1
    %319 = vsyncpa [#allocation5], 1
    %s320 = scalar_lea.sflag [#allocation5], 1
    %321 = vsyncpa %s320, 1

</llo_original>
